<compile_context>
chip_gen: v5e
topology: v5e:2x2
jax: 0.10.0
libtpu: 0.0.40
codegen_flags: <defaults>
</compile_context>

<pallas_src>
import jax
import jax.numpy as jnp
from jax.experimental import pallas as pl
from jax.experimental.pallas import tpu as pltpu

INPUT_SIZE = 132
HIDDEN1 = 256
HIDDEN2 = 128
NUM_CLASSES = 82
OUT_PAD = 128   # 82 -> 128: lane-dense output stores (real logits sliced by consumer)


def mlp_kernel(x_ref, w1_ref, b1_ref, w2_ref, b2_ref, w3_ref, b3_ref, o_ref):
    # fc1 + ReLU (dropout = identity at inference).
    # x arrives as f32 (tile, 132); cast to bf16 in VMEM (VPU, cheap) so the
    # matmul takes the fast MXU path.  K=132 is padded internally by Mosaic.
    x = x_ref[...].astype(jnp.bfloat16)
    h1 = jnp.dot(x, w1_ref[...], preferred_element_type=jnp.float32)
    h1 = jnp.maximum(h1 + b1_ref[...], 0.0)
    # fc2 + ReLU
    h2 = jnp.dot(h1.astype(jnp.bfloat16), w2_ref[...],
                 preferred_element_type=jnp.float32)
    h2 = jnp.maximum(h2 + b2_ref[...], 0.0)
    # output layer (no activation), padded to a lane-dense 128-wide slab
    out = jnp.dot(h2.astype(jnp.bfloat16), w3_ref[...],
                  preferred_element_type=jnp.float32)
    o_ref[...] = (out + b3_ref[...]).astype(o_ref.dtype)


def _choose_batch_tile(batch, max_tile=1024, split_threshold=512):
    """Pick (padded_batch, batch_tile).

    - Batch is rounded up to a multiple of 16 (native bf16 (16,128) packing,
      keeps loads/stores unmasked).
    - Small batches get a single grid step (single-TC v5e/v6e gain nothing
      from splitting; per-step overhead ~0.35 us dominates tiny tiles).
    - A 2-way split is used only when each half is >= split_threshold/2 rows,
      which lets v7x's two TensorCores share the "parallel" axis without
      starving either of work.
    """
    bp = ((batch + 15) // 16) * 16
    steps = -(-bp // max_tile)                       # cdiv
    if steps == 1 and bp >= split_threshold:
        steps = 2
    tile = ((-(-bp // steps) + 15) // 16) * 16       # cdiv, round to 16
    bp = steps * tile
    return bp, tile


def prepare_params(params):
    """One-time conversion of f32 params to kernel-ready (bf16 W, padded) form.

    Accepts biases as (N,) or (1, N); always returns (1, N) f32 biases.
    Call this ONCE and reuse the result across forward calls.
    """
    w1, b1, w2, b2, w3, b3 = params
    bf = jnp.bfloat16
    as_row = lambda b, n: jnp.asarray(b, jnp.float32).reshape(1, n)

    w1_k = jnp.asarray(w1, jnp.float32).astype(bf)                 # (132, 256)
    b1_k = as_row(b1, HIDDEN1)                                     # (1, 256)
    w2_k = jnp.asarray(w2, jnp.float32).astype(bf)                 # (256, 128)
    b2_k = as_row(b2, HIDDEN2)                                     # (1, 128)
    w3_k = jnp.zeros((HIDDEN2, OUT_PAD), bf).at[:, :NUM_CLASSES].set(
        jnp.asarray(w3, jnp.float32).astype(bf))                   # (128, 128)
    b3_k = jnp.zeros((1, OUT_PAD), jnp.float32).at[:, :NUM_CLASSES].set(
        as_row(b3, NUM_CLASSES))                                   # (1, 128)
    return (w1_k, b1_k, w2_k, b2_k, w3_k, b3_k)


def net_forward_padded(x, kparams, *, max_batch_tile=1024):
    """x: (B, 132) float32.  Returns the padded (Bp, 128) f32 logit slab.

    Consumers should slice [:B, :NUM_CLASSES] themselves (or consume the
    padded slab directly) so the hot path avoids an extra HBM pass.
    """
    w1, b1, w2, b2, w3, b3 = kparams
    B = x.shape[0]
    Bp, tile = _choose_batch_tile(B, max_batch_tile)
    grid = (Bp // tile,)

    # Only pad the batch dim if needed (no feature-dim padding, no recast).
    if Bp != B:
        x = jnp.pad(x, ((0, Bp - B), (0, 0)))

    full = lambda i: (0, 0)  # weights/biases: whole array, resident across grid

    flops = 2 * Bp * (INPUT_SIZE * HIDDEN1 + HIDDEN1 * HIDDEN2
                      + HIDDEN2 * OUT_PAD)
    bytes_accessed = (x.size * 4
                      + (w1.size + w2.size + w3.size) * 2
                      + (b1.size + b2.size + b3.size) * 4
                      + Bp * OUT_PAD * 4)

    out = pl.pallas_call(
        mlp_kernel,
        out_shape=jax.ShapeDtypeStruct((Bp, OUT_PAD), jnp.float32),
        grid=grid,
        in_specs=[
            # x: (tile, 132) — last dim equals full array dim, so legal.
            pl.BlockSpec((tile, INPUT_SIZE), lambda i: (i, 0)),
            pl.BlockSpec((INPUT_SIZE, HIDDEN1), full),
            pl.BlockSpec((1, HIDDEN1), full),
            pl.BlockSpec((HIDDEN1, HIDDEN2), full),
            pl.BlockSpec((1, HIDDEN2), full),
            pl.BlockSpec((HIDDEN2, OUT_PAD), full),
            pl.BlockSpec((1, OUT_PAD), full),
        ],
        out_specs=pl.BlockSpec((tile, OUT_PAD), lambda i: (i, 0)),
        compiler_params=pltpu.CompilerParams(
            dimension_semantics=("parallel",),
        ),
        cost_estimate=pl.CostEstimate(
            flops=flops, transcendentals=0, bytes_accessed=bytes_accessed),
    )(x, w1, b1, w2, b2, w3, b3)
    return out


def unpad_logits(out_padded, batch):
    """Consumer-side slice down to the real (batch, 82) logits."""
    return out_padded[:batch, :NUM_CLASSES]


def init_params(key):
    """Deterministic init mimicking nn.Linear's uniform(-1/sqrt(fan_in), ...)."""
    def linear(key, fan_in, fan_out):
        kw, kb = jax.random.split(key)
        bound = 1.0 / jnp.sqrt(fan_in)
        w = jax.random.uniform(kw, (fan_in, fan_out), jnp.float32, -bound, bound)
        b = jax.random.uniform(kb, (fan_out,), jnp.float32, -bound, bound)
        return w, b

    k1, k2, k3 = jax.random.split(key, 3)
    w1, b1 = linear(k1, INPUT_SIZE, HIDDEN1)
    w2, b2 = linear(k2, HIDDEN1, HIDDEN2)
    w3, b3 = linear(k3, HIDDEN2, NUM_CLASSES)
    return (w1, b1, w2, b2, w3, b3)


def reference_forward(x, params):
    """Pure-JAX reference on the same precision path (bf16 matmuls, f32 acc).

    NOTE: matmul operands are bf16 (inference contract); deviations from an
    all-f32 PyTorch forward are at the ~1e-2 level.  Dropout is identity
    (eval semantics); this path is not usable for training parity.
    """
    w1, b1, w2, b2, w3, b3 = params
    bf = jnp.bfloat16
    h1 = jnp.maximum(
        jnp.dot(x.astype(bf), w1.astype(bf),
                preferred_element_type=jnp.float32) + b1[None, :], 0.0)
    h2 = jnp.maximum(
        jnp.dot(h1.astype(bf), w2.astype(bf),
                preferred_element_type=jnp.float32) + b2[None, :], 0.0)
    return jnp.dot(h2.astype(bf), w3.astype(bf),
                   preferred_element_type=jnp.float32) + b3[None, :]


if __name__ == "__main__":
    key = jax.random.PRNGKey(0)
    kx, kp = jax.random.split(key)

    batch = 16  # small test batch; wrapper rounds/pads as needed
    x = jax.random.normal(kx, (batch, INPUT_SIZE), jnp.float32)
    params = init_params(kp)

    # One-time weight prep (cached across calls in real use).
    kparams = prepare_params(params)

    out_padded = net_forward_padded(x, kparams)
    out_padded = jax.block_until_ready(out_padded)
    out = unpad_logits(out_padded, batch)   # consumer-side slice

    ref = reference_forward(x, params)
    assert out.shape == (batch, NUM_CLASSES)
    assert jnp.allclose(out, ref, atol=1e-2, rtol=1e-2), "mismatch vs reference"

    print("KERNEL_OK")
</pallas_src>

<mosaic_0001>
module attributes {stable_mosaic.version = 11 : i64} {
  func.func @mlp_kernel(%arg0: i32, %arg1: memref<16x132xf32, #tpu.memory_space<vmem>>, %arg2: memref<132x256xbf16, #tpu.memory_space<vmem>>, %arg3: memref<1x256xf32, #tpu.memory_space<vmem>>, %arg4: memref<256x128xbf16, #tpu.memory_space<vmem>>, %arg5: memref<1x128xf32, #tpu.memory_space<vmem>>, %arg6: memref<128x128xbf16, #tpu.memory_space<vmem>>, %arg7: memref<1x128xf32, #tpu.memory_space<vmem>>, %arg8: memref<16x128xf32, #tpu.memory_space<vmem>>) attributes {dimension_semantics = [#tpu.dimension_semantics<parallel>], iteration_bounds = array<i64: 1>, scalar_prefetch = 0 : i64, scratch_operands = 0 : i64, tpu.core_type = #tpu.core_type<tc>, window_params = [{transform_indices = @transform_0, window_bounds = array<i64: 16, 132>}, {pipeline_mode = #tpu.pipeline_mode<synchronous>, transform_indices = @transform_1, window_bounds = array<i64: 132, 256>}, {pipeline_mode = #tpu.pipeline_mode<synchronous>, transform_indices = @transform_2, window_bounds = array<i64: 1, 256>}, {pipeline_mode = #tpu.pipeline_mode<synchronous>, transform_indices = @transform_3, window_bounds = array<i64: 256, 128>}, {pipeline_mode = #tpu.pipeline_mode<synchronous>, transform_indices = @transform_4, window_bounds = array<i64: 1, 128>}, {pipeline_mode = #tpu.pipeline_mode<synchronous>, transform_indices = @transform_5, window_bounds = array<i64: 128, 128>}, {pipeline_mode = #tpu.pipeline_mode<synchronous>, transform_indices = @transform_6, window_bounds = array<i64: 1, 128>}, {transform_indices = @transform_7, window_bounds = array<i64: 16, 128>}]} {
    %c0 = arith.constant 0 : index
    %c0_0 = arith.constant 0 : index
    %0 = vector.load %arg1[%c0, %c0_0] : memref<16x132xf32, #tpu.memory_space<vmem>>, vector<16x132xf32>
    %1 = arith.truncf %0 : vector<16x132xf32> to vector<16x132xbf16>
    %c0_1 = arith.constant 0 : index
    %c0_2 = arith.constant 0 : index
    %2 = vector.load %arg2[%c0_1, %c0_2] : memref<132x256xbf16, #tpu.memory_space<vmem>>, vector<132x256xbf16>
    %cst = arith.constant dense<0.000000e+00> : vector<16x256xf32>
    %3 = tpu.matmul %1, %2, %cst {dimension_numbers = #tpu.dot_dimension_numbers<[1], [0], [0], [1], [0, 0, 1, 1], [], []>} : vector<16x132xbf16>, vector<132x256xbf16>, vector<16x256xf32> -> vector<16x256xf32>
    %c0_3 = arith.constant 0 : index
    %c0_4 = arith.constant 0 : index
    %4 = vector.load %arg3[%c0_3, %c0_4] : memref<1x256xf32, #tpu.memory_space<vmem>>, vector<1x256xf32>
    %5 = vector.broadcast %4 : vector<1x256xf32> to vector<16x256xf32>
    %6 = arith.addf %3, %5 : vector<16x256xf32>
    %cst_5 = arith.constant 0.000000e+00 : f32
    %7 = vector.broadcast %cst_5 : f32 to vector<16x256xf32>
    %8 = arith.maximumf %6, %7 : vector<16x256xf32>
    %9 = arith.truncf %8 : vector<16x256xf32> to vector<16x256xbf16>
    %c0_6 = arith.constant 0 : index
    %c0_7 = arith.constant 0 : index
    %10 = vector.load %arg4[%c0_6, %c0_7] : memref<256x128xbf16, #tpu.memory_space<vmem>>, vector<256x128xbf16>
    %cst_8 = arith.constant dense<0.000000e+00> : vector<16x128xf32>
    %11 = tpu.matmul %9, %10, %cst_8 {dimension_numbers = #tpu.dot_dimension_numbers<[1], [0], [0], [1], [0, 0, 1, 1], [], []>} : vector<16x256xbf16>, vector<256x128xbf16>, vector<16x128xf32> -> vector<16x128xf32>
    %c0_9 = arith.constant 0 : index
    %c0_10 = arith.constant 0 : index
    %12 = vector.load %arg5[%c0_9, %c0_10] : memref<1x128xf32, #tpu.memory_space<vmem>>, vector<1x128xf32>
    %13 = vector.broadcast %12 : vector<1x128xf32> to vector<16x128xf32>
    %14 = arith.addf %11, %13 : vector<16x128xf32>
    %cst_11 = arith.constant 0.000000e+00 : f32
    %15 = vector.broadcast %cst_11 : f32 to vector<16x128xf32>
    %16 = arith.maximumf %14, %15 : vector<16x128xf32>
    %17 = arith.truncf %16 : vector<16x128xf32> to vector<16x128xbf16>
    %c0_12 = arith.constant 0 : index
    %c0_13 = arith.constant 0 : index
    %18 = vector.load %arg6[%c0_12, %c0_13] : memref<128x128xbf16, #tpu.memory_space<vmem>>, vector<128x128xbf16>
    %cst_14 = arith.constant dense<0.000000e+00> : vector<16x128xf32>
    %19 = tpu.matmul %17, %18, %cst_14 {dimension_numbers = #tpu.dot_dimension_numbers<[1], [0], [0], [1], [0, 0, 1, 1], [], []>} : vector<16x128xbf16>, vector<128x128xbf16>, vector<16x128xf32> -> vector<16x128xf32>
    %c0_15 = arith.constant 0 : index
    %c0_16 = arith.constant 0 : index
    %20 = vector.load %arg7[%c0_15, %c0_16] : memref<1x128xf32, #tpu.memory_space<vmem>>, vector<1x128xf32>
    %21 = vector.broadcast %20 : vector<1x128xf32> to vector<16x128xf32>
    %22 = arith.addf %19, %21 : vector<16x128xf32>
    %c0_17 = arith.constant 0 : index
    %c0_18 = arith.constant 0 : index
    %23 = vector.load %arg8[%c0_17, %c0_18] : memref<16x128xf32, #tpu.memory_space<vmem>>, vector<16x128xf32>
    tpu.vector_store %arg8[%c0_17, %c0_18], %22 {strides = array<i32>} : memref<16x128xf32, #tpu.memory_space<vmem>>, vector<16x128xf32>,
    return
  }
  func.func @transform_0(%arg0: i32) -> (i32, i32) {
    %c0_i32 = arith.constant 0 : i32
    %c0_i32_0 = arith.constant 0 : i32
    return %arg0, %c0_i32 : i32, i32
  }
  func.func @transform_1(%arg0: i32) -> (i32, i32) {
    %c0_i32 = arith.constant 0 : i32
    %c0_i32_0 = arith.constant 0 : i32
    %c0_i32_1 = arith.constant 0 : i32
    return %c0_i32, %c0_i32_0 : i32, i32
  }
  func.func @transform_2(%arg0: i32) -> (i32, i32) {
    %c0_i32 = arith.constant 0 : i32
    %c0_i32_0 = arith.constant 0 : i32
    %c0_i32_1 = arith.constant 0 : i32
    return %c0_i32, %c0_i32_0 : i32, i32
  }
  func.func @transform_3(%arg0: i32) -> (i32, i32) {
    %c0_i32 = arith.constant 0 : i32
    %c0_i32_0 = arith.constant 0 : i32
    %c0_i32_1 = arith.constant 0 : i32
    return %c0_i32, %c0_i32_0 : i32, i32
  }
  func.func @transform_4(%arg0: i32) -> (i32, i32) {
    %c0_i32 = arith.constant 0 : i32
    %c0_i32_0 = arith.constant 0 : i32
    %c0_i32_1 = arith.constant 0 : i32
    return %c0_i32, %c0_i32_0 : i32, i32
  }
  func.func @transform_5(%arg0: i32) -> (i32, i32) {
    %c0_i32 = arith.constant 0 : i32
    %c0_i32_0 = arith.constant 0 : i32
    %c0_i32_1 = arith.constant 0 : i32
    return %c0_i32, %c0_i32_0 : i32, i32
  }
  func.func @transform_6(%arg0: i32) -> (i32, i32) {
    %c0_i32 = arith.constant 0 : i32
    %c0_i32_0 = arith.constant 0 : i32
    %c0_i32_1 = arith.constant 0 : i32
    return %c0_i32, %c0_i32_0 : i32, i32
  }
  func.func @transform_7(%arg0: i32) -> (i32, i32) {
    %c0_i32 = arith.constant 0 : i32
    %c0_i32_0 = arith.constant 0 : i32
    return %arg0, %c0_i32 : i32, i32
  }
}

</mosaic_0001>

<llo_original>
// kernel: tpu_custom_call.1
$region0: #{tpu_custom_call.1}
  #allocation0 [shape = 'u32[]', space=smem, size = 0x4, offset = 0x4, fixed_abs, tag = 'smem constant byte address 0x4 - core index']
  #allocation1 [shape = 'u32[72,128]{1,0:T(1,128)}', space=vmem, size = 0x9000, scoped, tag = 'internal scratch']
  %s0 = inlined_call_operand.hbm [shape: f32[16,132], index: 0, kind: input, shape index: {}]
  %s1 = inlined_call_operand.hbm [shape: bf16[132,256], index: 1, kind: input, shape index: {}]
  %s2 = inlined_call_operand.hbm [shape: f32[1,256], index: 2, kind: input, shape index: {}]
  %s3 = inlined_call_operand.hbm [shape: bf16[256,128], index: 3, kind: input, shape index: {}]
  %s4 = inlined_call_operand.vmem [shape: f32[1,128], index: 4, kind: input, shape index: {}]
  %s5 = inlined_call_operand.hbm [shape: bf16[128,128], index: 5, kind: input, shape index: {}]
  %s6 = inlined_call_operand.vmem [shape: f32[1,128], index: 6, kind: input, shape index: {}]
  %s7 = inlined_call_operand.hbm [shape: f32[16,128], index: 7, kind: output, shape index: {}]
  %s8 = sld [smem:[#allocation0]]
  $region58: #{tpu_custom_call.1} parent=0
    _
  %s10 = ssub.s32 1, %s8
  %s11 = scalar_select 0, %s10, %s8
  $region1: #{tpu_custom_call.1} parent=0
    #allocation2 [shape = 'u8[16384]{0}', space=vmem, size = 0x4000, scoped, tag = 'input window, operand 0, single buffered']
    #allocation3 [shape = 's32[1]{0}', space=sflag, size = 0x4, scoped, tag = 'scoped memory for tpu_custom_call.1']
    #allocation4 [shape = 's32[1]{0}', space=sflag, size = 0x4, scoped, tag = 'scoped memory for tpu_custom_call.1']
    #allocation5 [shape = 'u8[69632]{0}', space=vmem, size = 0x11000, scoped, tag = 'input window, operand 1, single buffered']
    #allocation6 [shape = 's32[1]{0}', space=sflag, size = 0x4, scoped, tag = 'scoped memory for tpu_custom_call.1']
    #allocation7 [shape = 'u8[1024]{0}', space=vmem, size = 0x400, scoped, tag = 'input window, operand 2, single buffered']
    #allocation8 [shape = 'u8[65536]{0}', space=vmem, size = 0x10000, scoped, tag = 'input window, operand 3, single buffered']
    #allocation9 [shape = 's32[1]{0}', space=sflag, size = 0x4, scoped, tag = 'scoped memory for tpu_custom_call.1']
    #allocation10 [shape = 'u8[32768]{0}', space=vmem, size = 0x8000, scoped, tag = 'input window, operand 5, single buffered']
    #allocation11 [shape = 'u8[8192]{0}', space=vmem, size = 0x2000, scoped, tag = 'output window, operand 0, single buffered']
    %12 = vsyncpa [#allocation3], 0
    %13 = vsyncpa [#allocation6], 0
    %14 = vsyncpa [#allocation9], 0
    %15 = vsyncpa [#allocation4], 0
    // Predicated region
    $region2: #{tpu_custom_call.1} parent=1 // pred_check
      _
    $region3: #{tpu_custom_call.1} parent=1 // pred_check_branch
      %17 = sbr.rel (0) target = $region5
    $region4: #{tpu_custom_call.1} parent=1 // pred_region
      %19 = vsyncadd [#allocation3], 0
      %s20 = sshll.u32 %s0, 4
      %s21 = int_to_ptr.hbm [resolvable:$true] %s20
      %s22 = sshll.u32 [#allocation2], 4
      %s23 = int_to_ptr.vmem [resolvable:$true] %s22
      %28 = dma.hbm_to_vmem [thread:$0]  %s21, 512, %s23, [#allocation3], 256, 256, 16
    $region5: #{tpu_custom_call.1} parent=1 // pred_fallthru
      _
    // Predicated region
    $region6: #{tpu_custom_call.1} parent=1 // pred_check
      _
    $region7: #{tpu_custom_call.1} parent=1 // pred_check_branch
      %30 = sbr.rel (0) target = $region9
    $region8: #{tpu_custom_call.1} parent=1 // pred_region
      %32 = vsyncadd [#allocation6], 0
      %s33 = sshll.u32 %s1, 4
      %s34 = int_to_ptr.hbm [resolvable:$true] %s33
      %s35 = sshll.u32 [#allocation5], 4
      %s36 = int_to_ptr.vmem [resolvable:$true] %s35
      %41 = dma.hbm_to_vmem [thread:$0]  %s34, 2176, %s36, [#allocation6], 128, 128, 8
    $region9: #{tpu_custom_call.1} parent=1 // pred_fallthru
      _
    // Predicated region
    $region10: #{tpu_custom_call.1} parent=1 // pred_check
      _
    $region11: #{tpu_custom_call.1} parent=1 // pred_check_branch
      %43 = sbr.rel (0) target = $region13
    $region12: #{tpu_custom_call.1} parent=1 // pred_region
      %45 = vsyncadd [#allocation6], 0
      %s47 = sshll.u32 %s2, 4
      %s48 = int_to_ptr.hbm [resolvable:$true] %s47
      %s49 = sshll.u32 [#allocation7], 4
      %s50 = int_to_ptr.vmem [resolvable:$true] %s49
      %52 = dma.hbm_to_vmem [thread:$0]  %s48, 32, %s50, [#allocation6]
    $region13: #{tpu_custom_call.1} parent=1 // pred_fallthru
      _
    // Predicated region
    $region14: #{tpu_custom_call.1} parent=1 // pred_check
      _
    $region15: #{tpu_custom_call.1} parent=1 // pred_check_branch
      %54 = sbr.rel (0) target = $region17
    $region16: #{tpu_custom_call.1} parent=1 // pred_region
      %56 = vsyncadd [#allocation9], 0
      %s57 = sshll.u32 %s3, 4
      %s58 = int_to_ptr.hbm [resolvable:$true] %s57
      %s59 = sshll.u32 [#allocation8], 4
      %s60 = int_to_ptr.vmem [resolvable:$true] %s59
      %65 = dma.hbm_to_vmem [thread:$0]  %s58, 2048, %s60, [#allocation9], 64, 64, 4
    $region17: #{tpu_custom_call.1} parent=1 // pred_fallthru
      _
    // Predicated region
    $region18: #{tpu_custom_call.1} parent=1 // pred_check
      _
    $region19: #{tpu_custom_call.1} parent=1 // pred_check_branch
      %67 = sbr.rel (0) target = $region21
    $region20: #{tpu_custom_call.1} parent=1 // pred_region
      _
    $region21: #{tpu_custom_call.1} parent=1 // pred_fallthru
      _
    // Predicated region
    $region22: #{tpu_custom_call.1} parent=1 // pred_check
      _
    $region23: #{tpu_custom_call.1} parent=1 // pred_check_branch
      %69 = sbr.rel (0) target = $region25
    $region24: #{tpu_custom_call.1} parent=1 // pred_region
      %71 = vsyncadd [#allocation9], 0
      %s72 = sshll.u32 %s5, 4
      %s73 = int_to_ptr.hbm [resolvable:$true] %s72
      %s74 = sshll.u32 [#allocation10], 4
      %s75 = int_to_ptr.vmem [resolvable:$true] %s74
      %80 = dma.hbm_to_vmem [thread:$0]  %s73, 1024, %s75, [#allocation9], 64, 64, 4
    $region25: #{tpu_custom_call.1} parent=1 // pred_fallthru
      _
    // Predicated region
    $region26: #{tpu_custom_call.1} parent=1 // pred_check
      _
    $region27: #{tpu_custom_call.1} parent=1 // pred_check_branch
      %82 = sbr.rel (0) target = $region29
    $region28: #{tpu_custom_call.1} parent=1 // pred_region
      _
    $region29: #{tpu_custom_call.1} parent=1 // pred_fallthru
      _
    // Predicated region
    $region30: #{tpu_custom_call.1} parent=1 // pred_check
      _
    $region31: #{tpu_custom_call.1} parent=1 // pred_check_branch
      %84 = sbr.rel (0) target = $region33
    $region32: #{tpu_custom_call.1} parent=1 // pred_region
      %86 = dma.done [#allocation3], 512
    $region33: #{tpu_custom_call.1} parent=1 // pred_fallthru
      _
    // Predicated region
    $region34: #{tpu_custom_call.1} parent=1 // pred_check
      _
    $region35: #{tpu_custom_call.1} parent=1 // pred_check_branch
      %88 = sbr.rel (0) target = $region37
    $region36: #{tpu_custom_call.1} parent=1 // pred_region
      %90 = dma.done [#allocation6], 2176
    $region37: #{tpu_custom_call.1} parent=1 // pred_fallthru
      _
    // Predicated region
    $region38: #{tpu_custom_call.1} parent=1 // pred_check
      _
    $region39: #{tpu_custom_call.1} parent=1 // pred_check_branch
      %92 = sbr.rel (0) target = $region41
    $region40: #{tpu_custom_call.1} parent=1 // pred_region
      %94 = dma.done [#allocation6], 32
    $region41: #{tpu_custom_call.1} parent=1 // pred_fallthru
      _
    // Predicated region
    $region42: #{tpu_custom_call.1} parent=1 // pred_check
      _
    $region43: #{tpu_custom_call.1} parent=1 // pred_check_branch
      %96 = sbr.rel (0) target = $region45
    $region44: #{tpu_custom_call.1} parent=1 // pred_region
      %98 = dma.done [#allocation9], 2048
    $region45: #{tpu_custom_call.1} parent=1 // pred_fallthru
      _
    // Predicated region
    $region46: #{tpu_custom_call.1} parent=1 // pred_check
      _
    $region47: #{tpu_custom_call.1} parent=1 // pred_check_branch
      %100 = sbr.rel (0) target = $region49
    $region48: #{tpu_custom_call.1} parent=1 // pred_region
      %102 = dma.done [#allocation9], 1024
    $region49: #{tpu_custom_call.1} parent=1 // pred_fallthru
      _
    %v104 = vld [vmem:[#allocation2] sm:$0xff]
    %v105 = vld [vmem:[#allocation2 + $0x8] sm:$0xff]
    %v106 = vld [vmem:[#allocation2 + $0x10] sm:$0xff]
    %v107 = vld [vmem:[#allocation2 + $0x18] sm:$0xff]
    %v108 = vpack.c.bf16 %v106, %v104
    %v109 = vpack.c.bf16 %v107, %v105
    %v110 = vld [vmem:[#allocation5] sm:$0xff]
    %v111 = vld [vmem:[#allocation5 + $0x8] sm:$0xff]
    %v112 = vld [vmem:[#allocation5 + $0x10] sm:$0xff]
    %v113 = vld [vmem:[#allocation5 + $0x18] sm:$0xff]
    %v114 = vld [vmem:[#allocation5 + $0x20] sm:$0xff]
    %v115 = vld [vmem:[#allocation5 + $0x28] sm:$0xff]
    %v116 = vld [vmem:[#allocation5 + $0x30] sm:$0xff]
    %v117 = vld [vmem:[#allocation5 + $0x38] sm:$0xff]
    %v118 = vld [vmem:[#allocation5 + $0x40] sm:$0xff]
    %v119 = vld [vmem:[#allocation5 + $0x48] sm:$0xff]
    %v120 = vld [vmem:[#allocation5 + $0x50] sm:$0xff]
    %v121 = vld [vmem:[#allocation5 + $0x58] sm:$0xff]
    %v122 = vld [vmem:[#allocation5 + $0x60] sm:$0xff]
    %v123 = vld [vmem:[#allocation5 + $0x68] sm:$0xff]
    %v124 = vld [vmem:[#allocation5 + $0x70] sm:$0xff]
    %v125 = vld [vmem:[#allocation5 + $0x78] sm:$0xff]
    %v126 = vld [vmem:[#allocation5 + $0x80] sm:$0x33]
    %v127 = vld [vmem:[#allocation7] sm:$0x3]
    %v129 = vperm.slane %v127, 0
    %v130 = vperm.slane %v127, 1
    %v150 = vunpack.c.l.b16 %v110
    %v151 = vunpack.c.h.b16 %v110
    %v152 = vunpack.c.l.b16 %v111
    %v153 = vunpack.c.h.b16 %v111
    %v154 = vunpack.c.l.b16 %v112
    %v155 = vunpack.c.h.b16 %v112
    %v156 = vunpack.c.l.b16 %v113
    %v157 = vunpack.c.h.b16 %v113
    %v158 = vunpack.c.l.b16 %v114
    %v159 = vunpack.c.h.b16 %v114
    %v160 = vunpack.c.l.b16 %v115
    %v161 = vunpack.c.h.b16 %v115
    %v162 = vunpack.c.l.b16 %v116
    %v163 = vunpack.c.h.b16 %v116
    %v164 = vunpack.c.l.b16 %v117
    %v165 = vunpack.c.h.b16 %v117
    %v166 = vunpack.c.l.b16 %v118
    %v167 = vunpack.c.h.b16 %v118
    %v168 = vunpack.c.l.b16 %v119
    %v169 = vunpack.c.h.b16 %v119
    %v170 = vunpack.c.l.b16 %v120
    %v171 = vunpack.c.h.b16 %v120
    %v172 = vunpack.c.l.b16 %v121
    %v173 = vunpack.c.h.b16 %v121
    %v174 = vunpack.c.l.b16 %v122
    %v175 = vunpack.c.h.b16 %v122
    %v176 = vunpack.c.l.b16 %v123
    %v177 = vunpack.c.h.b16 %v123
    %v178 = vunpack.c.l.b16 %v124
    %v179 = vunpack.c.h.b16 %v124
    %v180 = vunpack.c.l.b16 %v125
    %v181 = vunpack.c.h.b16 %v125
    %v182 = vunpack.c.l.b16 %v126
    %v183 = vunpack.c.h.b16 %v126
    %v184 = vpack.c.b16 %v152, %v150
    %v185 = vpack.c.b16 %v153, %v151
    %v186 = vpack.c.b16 %v156, %v154
    %v187 = vpack.c.b16 %v157, %v155
    %v188 = vpack.c.b16 %v160, %v158
    %v189 = vpack.c.b16 %v161, %v159
    %v190 = vpack.c.b16 %v164, %v162
    %v191 = vpack.c.b16 %v165, %v163
    %v192 = vpack.c.b16 %v168, %v166
    %v193 = vpack.c.b16 %v169, %v167
    %v194 = vpack.c.b16 %v172, %v170
    %v195 = vpack.c.b16 %v173, %v171
    %v196 = vpack.c.b16 %v176, %v174
    %v197 = vpack.c.b16 %v177, %v175
    %v198 = vpack.c.b16 %v180, %v178
    %v199 = vpack.c.b16 %v181, %v179
    %v200 = vpack.c.b16 %v182, %v182
    %v201 = vpack.c.b16 %v183, %v183
    %vm218 = vcmask 31744
    %v220 = vsel %vm218, %v109, 0
    %vm222 = vcmask 1041408
    %v224 = vsel %vm222, %v200, 0
    %v227 = vsel %vm222, %v201, 0
    %229 = vmatpush.bf16.msra.mxu0 %v198
    %230 = vmatpush.bf16.msra.mxu0 %v196
    %231 = vmatpush.bf16.msra.mxu0 %v194
    %232 = vmatpush.bf16.msra.mxu0 %v192
    %233 = vmatpush.bf16.msra.mxu0 %v190
    %234 = vmatpush.bf16.msra.mxu0 %v188
    %235 = vmatpush.bf16.msra.mxu0 %v186
    %236 = vmatpush.bf16.msra.mxu0 %v184
    %237 = vmatmul.bf16.gmra.mxu0 %v108
    %v238 = vpop.f32.mrf.mxu0
    %v239 = vadd.f32 %v129, %v238
    %v240 = vpop.f32.mrf.mxu0
    %v241 = vadd.f32 %v129, %v240
    %242 = vdwg.mxu0
    %243 = vmatpush.bf16.msra.mxu0 0
    %244 = vmatpush.bf16.msra.mxu0 0
    %245 = vmatpush.bf16.msra.mxu0 0
    %246 = vmatpush.bf16.msra.mxu0 0
    %247 = vmatpush.bf16.msra.mxu0 0
    %248 = vmatpush.bf16.msra.mxu0 0
    %249 = vmatpush.bf16.msra.mxu0 0
    %250 = vmatpush.bf16.msra.mxu0 %v224
    %251 = vmatmul.bf16.gmra.mxu0 %v220
    %v252 = vpop.f32.mrf.mxu0
    %v253 = vadd.f32 %v239, %v252
    %v254 = vpop.f32.mrf.mxu0
    %v255 = vadd.f32 %v241, %v254
    %256 = vdwg.mxu0
    %257 = vmatpush.bf16.msra.mxu0 %v199
    %258 = vmatpush.bf16.msra.mxu0 %v197
    %259 = vmatpush.bf16.msra.mxu0 %v195
    %260 = vmatpush.bf16.msra.mxu0 %v193
    %261 = vmatpush.bf16.msra.mxu0 %v191
    %262 = vmatpush.bf16.msra.mxu0 %v189
    %263 = vmatpush.bf16.msra.mxu0 %v187
    %264 = vmatpush.bf16.msra.mxu0 %v185
    %265 = vmatmul.bf16.gmra.mxu0 %v108
    %v266 = vpop.f32.mrf.mxu0
    %v267 = vadd.f32 %v130, %v266
    %v268 = vpop.f32.mrf.mxu0
    %v269 = vadd.f32 %v130, %v268
    %270 = vdwg.mxu0
    %271 = vmatpush.bf16.msra.mxu0 0
    %272 = vmatpush.bf16.msra.mxu0 0
    %273 = vmatpush.bf16.msra.mxu0 0
    %274 = vmatpush.bf16.msra.mxu0 0
    %275 = vmatpush.bf16.msra.mxu0 0
    %276 = vmatpush.bf16.msra.mxu0 0
    %277 = vmatpush.bf16.msra.mxu0 0
    %278 = vmatpush.bf16.msra.mxu0 %v227
    %279 = vmatmul.bf16.gmra.mxu0 %v220
    %v280 = vpop.f32.mrf.mxu0
    %v281 = vadd.f32 %v267, %v280
    %v282 = vpop.f32.mrf.mxu0
    %v283 = vadd.f32 %v269, %v282
    %284 = vdwg.mxu0
    %v285 = vmax.f32 %v253, 0.0
    %v286 = vmax.f32 %v281, 0.0
    %v287 = vmax.f32 %v255, 0.0
    %v288 = vmax.f32 %v283, 0.0
    %v289 = vpack.c.bf16 %v287, %v285
    %v290 = vpack.c.bf16 %v288, %v286
    %v291 = vld [vmem:[#allocation8] sm:$0xf]
    %v292 = vld [vmem:[#allocation8 + $0x4] sm:$0xf]
    %v293 = vld [vmem:[#allocation8 + $0x8] sm:$0xf]
    %v294 = vld [vmem:[#allocation8 + $0xc] sm:$0xf]
    %v295 = vld [vmem:[#allocation8 + $0x10] sm:$0xf]
    %v296 = vld [vmem:[#allocation8 + $0x14] sm:$0xf]
    %v297 = vld [vmem:[#allocation8 + $0x18] sm:$0xf]
    %v298 = vld [vmem:[#allocation8 + $0x1c] sm:$0xf]
    %v299 = vld [vmem:[#allocation8 + $0x20] sm:$0xf]
    %v300 = vld [vmem:[#allocation8 + $0x24] sm:$0xf]
    %v301 = vld [vmem:[#allocation8 + $0x28] sm:$0xf]
    %v302 = vld [vmem:[#allocation8 + $0x2c] sm:$0xf]
    %v303 = vld [vmem:[#allocation8 + $0x30] sm:$0xf]
    %v304 = vld [vmem:[#allocation8 + $0x34] sm:$0xf]
    %v305 = vld [vmem:[#allocation8 + $0x38] sm:$0xf]
    %v306 = vld [vmem:[#allocation8 + $0x3c] sm:$0xf]
    %v307 = vld [vmem:[#allocation8 + $0x40] sm:$0xf]
    %v308 = vld [vmem:[#allocation8 + $0x44] sm:$0xf]
    %v309 = vld [vmem:[#allocation8 + $0x48] sm:$0xf]
    %v310 = vld [vmem:[#allocation8 + $0x4c] sm:$0xf]
    %v311 = vld [vmem:[#allocation8 + $0x50] sm:$0xf]
    %v312 = vld [vmem:[#allocation8 + $0x54] sm:$0xf]
    %v313 = vld [vmem:[#allocation8 + $0x58] sm:$0xf]
    %v314 = vld [vmem:[#allocation8 + $0x5c] sm:$0xf]
    %v315 = vld [vmem:[#allocation8 + $0x60] sm:$0xf]
    %v316 = vld [vmem:[#allocation8 + $0x64] sm:$0xf]
    %v317 = vld [vmem:[#allocation8 + $0x68] sm:$0xf]
    %v318 = vld [vmem:[#allocation8 + $0x6c] sm:$0xf]
    %v319 = vld [vmem:[#allocation8 + $0x70] sm:$0xf]
    %v320 = vld [vmem:[#allocation8 + $0x74] sm:$0xf]
    %v321 = vld [vmem:[#allocation8 + $0x78] sm:$0xf]
    %v322 = vld [vmem:[#allocation8 + $0x7c] sm:$0xf]
    %v323 = vld [vmem:[%s4] sm:$0x1]
    %v325 = vperm.slane %v323, 0
    %v359 = vunpack.c.l.b16 %v291
    %v360 = vunpack.c.l.b16 %v292
    %v361 = vunpack.c.l.b16 %v293
    %v362 = vunpack.c.l.b16 %v294
    %v363 = vunpack.c.l.b16 %v295
    %v364 = vunpack.c.l.b16 %v296
    %v365 = vunpack.c.l.b16 %v297
    %v366 = vunpack.c.l.b16 %v298
    %v367 = vunpack.c.l.b16 %v299
    %v368 = vunpack.c.l.b16 %v300
    %v369 = vunpack.c.l.b16 %v301
    %v370 = vunpack.c.l.b16 %v302
    %v371 = vunpack.c.l.b16 %v303
    %v372 = vunpack.c.l.b16 %v304
    %v373 = vunpack.c.l.b16 %v305
    %v374 = vunpack.c.l.b16 %v306
    %v375 = vunpack.c.l.b16 %v307
    %v376 = vunpack.c.l.b16 %v308
    %v377 = vunpack.c.l.b16 %v309
    %v378 = vunpack.c.l.b16 %v310
    %v379 = vunpack.c.l.b16 %v311
    %v380 = vunpack.c.l.b16 %v312
    %v381 = vunpack.c.l.b16 %v313
    %v382 = vunpack.c.l.b16 %v314
    %v383 = vunpack.c.l.b16 %v315
    %v384 = vunpack.c.l.b16 %v316
    %v385 = vunpack.c.l.b16 %v317
    %v386 = vunpack.c.l.b16 %v318
    %v387 = vunpack.c.l.b16 %v319
    %v388 = vunpack.c.l.b16 %v320
    %v389 = vunpack.c.l.b16 %v321
    %v390 = vunpack.c.l.b16 %v322
    %v391 = vpack.c.b16 %v360, %v359
    %v392 = vpack.c.b16 %v362, %v361
    %v393 = vpack.c.b16 %v364, %v363
    %v394 = vpack.c.b16 %v366, %v365
    %v395 = vpack.c.b16 %v368, %v367
    %v396 = vpack.c.b16 %v370, %v369
    %v397 = vpack.c.b16 %v372, %v371
    %v398 = vpack.c.b16 %v374, %v373
    %v399 = vpack.c.b16 %v376, %v375
    %v400 = vpack.c.b16 %v378, %v377
    %v401 = vpack.c.b16 %v380, %v379
    %v402 = vpack.c.b16 %v382, %v381
    %v403 = vpack.c.b16 %v384, %v383
    %v404 = vpack.c.b16 %v386, %v385
    %v405 = vpack.c.b16 %v388, %v387
    %v406 = vpack.c.b16 %v390, %v389
    %423 = vmatpush.bf16.msra.mxu0 %v398
    %424 = vmatpush.bf16.msra.mxu0 %v397
    %425 = vmatpush.bf16.msra.mxu0 %v396
    %426 = vmatpush.bf16.msra.mxu0 %v395
    %427 = vmatpush.bf16.msra.mxu0 %v394
    %428 = vmatpush.bf16.msra.mxu0 %v393
    %429 = vmatpush.bf16.msra.mxu0 %v392
    %430 = vmatpush.bf16.msra.mxu0 %v391
    %431 = vmatmul.bf16.gmra.mxu0 %v289
    %v432 = vpop.f32.mrf.mxu0
    %v433 = vadd.f32 %v325, %v432
    %v434 = vpop.f32.mrf.mxu0
    %v435 = vadd.f32 %v325, %v434
    %436 = vdwg.mxu0
    %437 = vmatpush.bf16.msra.mxu0 %v406
    %438 = vmatpush.bf16.msra.mxu0 %v405
    %439 = vmatpush.bf16.msra.mxu0 %v404
    %440 = vmatpush.bf16.msra.mxu0 %v403
    %441 = vmatpush.bf16.msra.mxu0 %v402
    %442 = vmatpush.bf16.msra.mxu0 %v401
    %443 = vmatpush.bf16.msra.mxu0 %v400
    %444 = vmatpush.bf16.msra.mxu0 %v399
    %445 = vmatmul.bf16.gmra.mxu0 %v290
    %v446 = vpop.f32.mrf.mxu0
    %v447 = vadd.f32 %v433, %v446
    %v448 = vpop.f32.mrf.mxu0
    %v449 = vadd.f32 %v435, %v448
    %450 = vdwg.mxu0
    %v451 = vmax.f32 %v447, 0.0
    %v452 = vmax.f32 %v449, 0.0
    %v453 = vpack.c.bf16 %v452, %v451
    %v454 = vld [vmem:[#allocation10] sm:$0xf]
    %v455 = vld [vmem:[#allocation10 + $0x4] sm:$0xf]
    %v456 = vld [vmem:[#allocation10 + $0x8] sm:$0xf]
    %v457 = vld [vmem:[#allocation10 + $0xc] sm:$0xf]
    %v458 = vld [vmem:[#allocation10 + $0x10] sm:$0xf]
    %v459 = vld [vmem:[#allocation10 + $0x14] sm:$0xf]
    %v460 = vld [vmem:[#allocation10 + $0x18] sm:$0xf]
    %v461 = vld [vmem:[#allocation10 + $0x1c] sm:$0xf]
    %v462 = vld [vmem:[#allocation10 + $0x20] sm:$0xf]
    %v463 = vld [vmem:[#allocation10 + $0x24] sm:$0xf]
    %v464 = vld [vmem:[#allocation10 + $0x28] sm:$0xf]
    %v465 = vld [vmem:[#allocation10 + $0x2c] sm:$0xf]
    %v466 = vld [vmem:[#allocation10 + $0x30] sm:$0xf]
    %v467 = vld [vmem:[#allocation10 + $0x34] sm:$0xf]
    %v468 = vld [vmem:[#allocation10 + $0x38] sm:$0xf]
    %v469 = vld [vmem:[#allocation10 + $0x3c] sm:$0xf]
    %v470 = vld [vmem:[%s6] sm:$0x1]
    %v472 = vperm.slane %v470, 0
    %v490 = vunpack.c.l.b16 %v454
    %v491 = vunpack.c.l.b16 %v455
    %v492 = vunpack.c.l.b16 %v456
    %v493 = vunpack.c.l.b16 %v457
    %v494 = vunpack.c.l.b16 %v458
    %v495 = vunpack.c.l.b16 %v459
    %v496 = vunpack.c.l.b16 %v460
    %v497 = vunpack.c.l.b16 %v461
    %v498 = vunpack.c.l.b16 %v462
    %v499 = vunpack.c.l.b16 %v463
    %v500 = vunpack.c.l.b16 %v464
    %v501 = vunpack.c.l.b16 %v465
    %v502 = vunpack.c.l.b16 %v466
    %v503 = vunpack.c.l.b16 %v467
    %v504 = vunpack.c.l.b16 %v468
    %v505 = vunpack.c.l.b16 %v469
    %v506 = vpack.c.b16 %v491, %v490
    %v507 = vpack.c.b16 %v493, %v492
    %v508 = vpack.c.b16 %v495, %v494
    %v509 = vpack.c.b16 %v497, %v496
    %v510 = vpack.c.b16 %v499, %v498
    %v511 = vpack.c.b16 %v501, %v500
    %v512 = vpack.c.b16 %v503, %v502
    %v513 = vpack.c.b16 %v505, %v504
    %522 = vmatpush.bf16.msra.mxu0 %v513
    %523 = vmatpush.bf16.msra.mxu0 %v512
    %524 = vmatpush.bf16.msra.mxu0 %v511
    %525 = vmatpush.bf16.msra.mxu0 %v510
    %526 = vmatpush.bf16.msra.mxu0 %v509
    %527 = vmatpush.bf16.msra.mxu0 %v508
    %528 = vmatpush.bf16.msra.mxu0 %v507
    %529 = vmatpush.bf16.msra.mxu0 %v506
    %530 = vmatmul.bf16.gmra.mxu0 %v453
    %v531 = vpop.f32.mrf.mxu0
    %v532 = vadd.f32 %v472, %v531
    %v533 = vpop.f32.mrf.mxu0
    %v534 = vadd.f32 %v472, %v533
    %535 = vdwg.mxu0
    %536 = vst [vmem:[#allocation11] sm:$0xff] %v532
    %537 = vst [vmem:[#allocation11 + $0x8] sm:$0xff] %v534
    // Predicated region
    $region50: #{tpu_custom_call.1} parent=1 // pred_check
      _
    $region51: #{tpu_custom_call.1} parent=1 // pred_check_branch
      %539 = sbr.rel (0) target = $region53
    $region52: #{tpu_custom_call.1} parent=1 // pred_region
      %541 = vsyncadd [#allocation4], 0
      %s542 = sshll.u32 [#allocation11], 4
      %s543 = int_to_ptr.vmem [resolvable:$true] %s542
      %s544 = sshll.u32 %s7, 4
      %s545 = int_to_ptr.hbm [resolvable:$true] %s544
      %550 = dma.vmem_to_hbm [thread:$0]  %s543, 256, %s545, [#allocation4], 128, 128, 8
    $region53: #{tpu_custom_call.1} parent=1 // pred_fallthru
      _
    // Predicated region
    $region54: #{tpu_custom_call.1} parent=1 // pred_check
      _
    $region55: #{tpu_custom_call.1} parent=1 // pred_check_branch
      %552 = sbr.rel (0) target = $region57
    $region56: #{tpu_custom_call.1} parent=1 // pred_region
      %554 = dma.done [#allocation4], 256
    $region57: #{tpu_custom_call.1} parent=1 // pred_fallthru
      _
    %555 = vsyncpa [#allocation3], 1
    %556 = vsyncpa [#allocation6], 1
    %557 = vsyncpa [#allocation9], 1
    %558 = vsyncpa [#allocation4], 1

</llo_original>
